<compile_context>
chip_gen: v7x
topology: tpu7x:2x2x1
jax: 0.10.0
libtpu: 0.0.40
codegen_flags: <defaults>
</compile_context>

<pallas_src>
import functools

import jax
import jax.numpy as jnp
from jax import lax
from jax.experimental import pallas as pl
from jax.experimental.pallas import tpu as pltpu

# --- loss configuration (mirrors LossManager.__init__ args) ------------------
W_L1 = 0.10          # penalties[0]['weight']   (L1Loss, mean)
W_HUBER = 0.05       # penalties[1]['weight']   (SmoothL1Loss, beta=1, mean)
HUBER_BETA = 1.0

# Weighted per-element contribution, weights folded into the Huber branches:
#   |d| <  beta : (1 + w_h*0.5/beta) * d^2 + w_l1 * |d|
#   |d| >= beta :                      d^2 + (w_l1 + w_h) * |d| - w_h*0.5*beta
CA_SQ = 1.0 + W_HUBER * 0.5 / HUBER_BETA
CA_AD = W_L1
CB_AD = W_L1 + W_HUBER
CB_C = -W_HUBER * 0.5 * HUBER_BETA

LANES = 128
MAX_TILE_R = 2048    # (2048,128) f32 tile = 1 MiB per input pipeline buffer


def _round_up(x, m):
    return ((x + m - 1) // m) * m


def _loss_kernel(p_ref, t_ref, o_ref, acc_ref, *, inv_n, tile_r, tail_rows):
    """Accumulate the weighted per-element loss; reduce to a scalar once."""
    i = pl.program_id(0)
    last = pl.num_programs(0) - 1

    @pl.when(i == 0)
    def _init():
        acc_ref[...] = jnp.zeros_like(acc_ref)

    d = p_ref[...].astype(jnp.float32) - t_ref[...].astype(jnp.float32)
    ad = jnp.abs(d)
    sq = d * d
    contrib = jnp.where(ad < HUBER_BETA,
                        CA_SQ * sq + CA_AD * ad,
                        sq + CB_AD * ad + CB_C)

    if tail_rows == tile_r:
        # Grid divides the row count exactly: no masking anywhere.
        acc_ref[...] += contrib
    else:
        # Only the final block is partial; mask it there (and only there) so
        # the steady-state step keeps the minimal VALU count.
        @pl.when(i < last)
        def _full():
            acc_ref[...] += contrib

        @pl.when(i == last)
        def _partial():
            row = lax.broadcasted_iota(jnp.int32, (tile_r, LANES), 0)
            acc_ref[...] += jnp.where(row < tail_rows, contrib, 0.0)

    @pl.when(i == last)
    def _finalize():
        # Single cross-lane/sublane reduction, outside the hot loop.
        o_ref[...] = jnp.sum(acc_ref[...], keepdims=True) * inv_n


def loss_manager_reference(predict, target):
    """Pure-jnp reference: MSE + 0.1*L1 + 0.05*SmoothL1(beta=1), mean-reduced."""
    d = predict.astype(jnp.float32) - target.astype(jnp.float32)
    ad = jnp.abs(d)
    mse = jnp.mean(d * d)
    l1 = jnp.mean(ad)
    hub = jnp.mean(jnp.where(ad < HUBER_BETA,
                             0.5 * d * d / HUBER_BETA,
                             ad - 0.5 * HUBER_BETA))
    return mse + W_L1 * l1 + W_HUBER * hub


def loss_manager_forward(predict, target, *, small_n_threshold=0):
    """Scalar loss = MSE + 0.1*L1 + 0.05*SmoothL1(beta=1), all mean over true N."""
    assert predict.shape == target.shape
    n_total = int(predict.size)

    # Small-N fast path: below the threshold, kernel-launch + plumbing dominate
    # and XLA fusion wins (production would set this to ~1<<17). Default 0 so
    # the demo below always exercises the Pallas kernel.
    if n_total <= small_n_threshold:
        return loss_manager_reference(predict, target)

    itemsize = jnp.dtype(predict.dtype).itemsize
    # Sublane multiple for the native packed layout: f32 -> 8, bf16 -> 16, i8 -> 32.
    sub = 8 * max(1, 4 // max(1, itemsize))

    # Lane-dense [rows, 128] view. When n_total is a multiple of 128 (common
    # case) this is a zero-copy reshape; otherwise pad only to the next 128
    # boundary (NOT to the tile grid). Padded zeros contribute exactly 0 to all
    # three terms and the mean denominators use the TRUE element count.
    rows = max(pl.cdiv(n_total, LANES), sub)
    padded = rows * LANES
    p_flat = predict.reshape(-1)
    t_flat = target.reshape(-1)
    if padded != n_total:
        p_flat = jnp.pad(p_flat, (0, padded - n_total))
        t_flat = jnp.pad(t_flat, (0, padded - n_total))
    p2 = p_flat.reshape(rows, LANES)
    t2 = t_flat.reshape(rows, LANES)

    # Fit the tile to the work (balanced steps) instead of padding a nearly
    # empty extra tile; the ragged last tile is masked in-kernel.
    steps_hint = pl.cdiv(rows, MAX_TILE_R)
    tile_r = _round_up(pl.cdiv(rows, steps_hint), sub)
    tile_r = min(tile_r, (rows // sub) * sub, MAX_TILE_R)
    nsteps = pl.cdiv(rows, tile_r)
    tail_rows = rows - (nsteps - 1) * tile_r

    # 3-deep input buffering once the grid is long enough to benefit.
    pipeline_mode = pl.Buffered(3) if nsteps >= 4 else None
    in_spec = pl.BlockSpec((tile_r, LANES), lambda i: (i, 0),
                           pipeline_mode=pipeline_mode)

    kernel = functools.partial(_loss_kernel, inv_n=1.0 / float(n_total),
                               tile_r=tile_r, tail_rows=tail_rows)

    out = pl.pallas_call(
        kernel,
        out_shape=jax.ShapeDtypeStruct((1, 1), jnp.float32),
        grid_spec=pltpu.PrefetchScalarGridSpec(
            num_scalar_prefetch=0,
            grid=(nsteps,),
            in_specs=[in_spec, in_spec],
            out_specs=pl.BlockSpec((1, 1), lambda i: (0, 0)),
            scratch_shapes=[pltpu.VMEM((tile_r, LANES), jnp.float32)],
        ),
        compiler_params=pltpu.CompilerParams(
            dimension_semantics=("arbitrary",)),
        cost_estimate=pl.CostEstimate(
            flops=12 * n_total,
            transcendentals=0,
            bytes_accessed=2 * n_total * itemsize + 4),
    )(p2, t2)
    return out[0, 0]


if __name__ == "__main__":
    key = jax.random.PRNGKey(0)

    def _check(p, t):
        loss = loss_manager_forward(p, t)
        jax.block_until_ready(loss)
        ref = loss_manager_reference(p, t)
        assert jnp.allclose(loss, ref, atol=1e-5, rtol=1e-4), (loss, ref)
        return loss

    # Primary small NCHW example consistent with the module: batch=2, C=4, 16x16.
    kp, kt, key = jax.random.split(key, 3)
    _check(jax.random.normal(kp, (2, 4, 16, 16), dtype=jnp.float32),
           jax.random.normal(kt, (2, 4, 16, 16), dtype=jnp.float32))

    # Ragged size: exercises the minimal 128-pad + in-kernel last-tile row mask.
    kp, kt, key = jax.random.split(key, 3)
    _check(jax.random.normal(kp, (2, 3, 37, 53), dtype=jnp.float32),
           jax.random.normal(kt, (2, 3, 37, 53), dtype=jnp.float32))

    # Larger size: multi-step pipeline with 2048-row tiles and Buffered(3).
    kp, kt, key = jax.random.split(key, 3)
    _check(jax.random.normal(kp, (8, 16, 128, 128), dtype=jnp.float32),
           jax.random.normal(kt, (8, 16, 128, 128), dtype=jnp.float32))

    # bf16 inputs stream at native width and are upcast to f32 inside the kernel.
    kp, kt, key = jax.random.split(key, 3)
    _check(jax.random.normal(kp, (2, 4, 32, 32), dtype=jnp.bfloat16),
           jax.random.normal(kt, (2, 4, 32, 32), dtype=jnp.bfloat16))

    print("KERNEL_OK")
</pallas_src>

<mosaic_0001>
module attributes {stable_mosaic.version = 11 : i64} {
  func.func @_loss_kernel(%arg0: i32, %arg1: memref<16x128xf32, #tpu.memory_space<vmem>>, %arg2: memref<16x128xf32, #tpu.memory_space<vmem>>, %arg3: memref<1x1xf32, #tpu.memory_space<vmem>>, %arg4: memref<16x128xf32, #tpu.memory_space<vmem>>) attributes {dimension_semantics = [#tpu.dimension_semantics<arbitrary>], iteration_bounds = array<i64: 1>, scalar_prefetch = 0 : i64, scratch_operands = 1 : i64, tpu.core_type = #tpu.core_type<tc>, window_params = [{transform_indices = @transform_0, window_bounds = array<i64: 16, 128>}, {transform_indices = @transform_1, window_bounds = array<i64: 16, 128>}, {pipeline_mode = #tpu.pipeline_mode<synchronous>, transform_indices = @transform_2, window_bounds = array<i64: 1, 1>}]} {
    %c0_i32 = arith.constant 0 : i32
    %0 = arith.cmpi eq, %arg0, %c0_i32 : i32
    %1 = arith.extui %0 : i1 to i32
    %c0_i32_0 = arith.constant 0 : i32
    %2 = arith.cmpi ne, %1, %c0_i32_0 : i32
    scf.if %2 {
      %cst_14 = arith.constant 0.000000e+00 : f32
      %27 = vector.broadcast %cst_14 : f32 to vector<16x128xf32>
      %c0_15 = arith.constant 0 : index
      %c0_16 = arith.constant 0 : index
      %28 = vector.load %arg4[%c0_15, %c0_16] : memref<16x128xf32, #tpu.memory_space<vmem>>, vector<16x128xf32>
      tpu.vector_store %arg4[%c0_15, %c0_16], %27 {strides = array<i32>} : memref<16x128xf32, #tpu.memory_space<vmem>>, vector<16x128xf32>,
    } else {
    }
    %c0 = arith.constant 0 : index
    %c0_1 = arith.constant 0 : index
    %3 = vector.load %arg1[%c0, %c0_1] : memref<16x128xf32, #tpu.memory_space<vmem>>, vector<16x128xf32>
    %c0_2 = arith.constant 0 : index
    %c0_3 = arith.constant 0 : index
    %4 = vector.load %arg2[%c0_2, %c0_3] : memref<16x128xf32, #tpu.memory_space<vmem>>, vector<16x128xf32>
    %5 = arith.subf %3, %4 : vector<16x128xf32>
    %6 = math.absf %5 : vector<16x128xf32>
    %7 = arith.mulf %5, %5 : vector<16x128xf32>
    %cst = arith.constant 1.000000e+00 : f32
    %8 = vector.broadcast %cst : f32 to vector<16x128xf32>
    %9 = arith.cmpf olt, %6, %8 : vector<16x128xf32>
    %cst_4 = arith.constant 1.025000e+00 : f32
    %10 = vector.broadcast %cst_4 : f32 to vector<16x128xf32>
    %11 = arith.mulf %10, %7 : vector<16x128xf32>
    %cst_5 = arith.constant 1.000000e-01 : f32
    %12 = vector.broadcast %cst_5 : f32 to vector<16x128xf32>
    %13 = arith.mulf %12, %6 : vector<16x128xf32>
    %14 = arith.addf %11, %13 : vector<16x128xf32>
    %cst_6 = arith.constant 1.500000e-01 : f32
    %15 = vector.broadcast %cst_6 : f32 to vector<16x128xf32>
    %16 = arith.mulf %15, %6 : vector<16x128xf32>
    %17 = arith.addf %7, %16 : vector<16x128xf32>
    %cst_7 = arith.constant -2.500000e-02 : f32
    %18 = vector.broadcast %cst_7 : f32 to vector<16x128xf32>
    %19 = arith.addf %17, %18 : vector<16x128xf32>
    %20 = arith.select %9, %14, %19 : vector<16x128xi1>, vector<16x128xf32>
    %c0_8 = arith.constant 0 : index
    %c0_9 = arith.constant 0 : index
    %21 = vector.load %arg4[%c0_8, %c0_9] : memref<16x128xf32, #tpu.memory_space<vmem>>, vector<16x128xf32>
    %22 = arith.addf %21, %20 : vector<16x128xf32>
    %c0_10 = arith.constant 0 : index
    %c0_11 = arith.constant 0 : index
    %23 = vector.load %arg4[%c0_10, %c0_11] : memref<16x128xf32, #tpu.memory_space<vmem>>, vector<16x128xf32>
    tpu.vector_store %arg4[%c0_10, %c0_11], %22 {strides = array<i32>} : memref<16x128xf32, #tpu.memory_space<vmem>>, vector<16x128xf32>,
    %c0_i32_12 = arith.constant 0 : i32
    %24 = arith.cmpi eq, %arg0, %c0_i32_12 : i32
    %25 = arith.extui %24 : i1 to i32
    %c0_i32_13 = arith.constant 0 : i32
    %26 = arith.cmpi ne, %25, %c0_i32_13 : i32
    scf.if %26 {
      %c0_14 = arith.constant 0 : index
      %c0_15 = arith.constant 0 : index
      %27 = vector.load %arg4[%c0_14, %c0_15] : memref<16x128xf32, #tpu.memory_space<vmem>>, vector<16x128xf32>
      %28 = vector.shape_cast %27 : vector<16x128xf32> to vector<1x16x128xf32>
      %cst_16 = arith.constant dense<0.000000e+00> : vector<1xf32>
      %29 = vector.multi_reduction <add>, %28, %cst_16 [1, 2] : vector<1x16x128xf32> to vector<1xf32>
      %30 = vector.shape_cast %29 : vector<1xf32> to vector<1x1x1xf32>
      %31 = vector.extract %30[0, 0, 0] : f32 from vector<1x1x1xf32>
      %32 = vector.broadcast %31 : f32 to vector<1x1xf32>
      %cst_17 = arith.constant 4.8828125E-4 : f32
      %33 = vector.broadcast %cst_17 : f32 to vector<1x1xf32>
      %34 = arith.mulf %32, %33 : vector<1x1xf32>
      %c0_18 = arith.constant 0 : index
      %c0_19 = arith.constant 0 : index
      %35 = vector.load %arg3[%c0_18, %c0_19] : memref<1x1xf32, #tpu.memory_space<vmem>>, vector<1x1xf32>
      tpu.vector_store %arg3[%c0_18, %c0_19], %34 {strides = array<i32>} : memref<1x1xf32, #tpu.memory_space<vmem>>, vector<1x1xf32>,
    } else {
    }
    return
  }
  func.func @transform_0(%arg0: i32) -> (i32, i32) {
    %c0_i32 = arith.constant 0 : i32
    %c0_i32_0 = arith.constant 0 : i32
    return %arg0, %c0_i32 : i32, i32
  }
  func.func @transform_1(%arg0: i32) -> (i32, i32) {
    %c0_i32 = arith.constant 0 : i32
    %c0_i32_0 = arith.constant 0 : i32
    return %arg0, %c0_i32 : i32, i32
  }
  func.func @transform_2(%arg0: i32) -> (i32, i32) {
    %c0_i32 = arith.constant 0 : i32
    %c0_i32_0 = arith.constant 0 : i32
    %c0_i32_1 = arith.constant 0 : i32
    return %c0_i32, %c0_i32_0 : i32, i32
  }
}

</mosaic_0001>

<llo_original>
// kernel: tpu_custom_call.1
$region0: #{tpu_custom_call.1}
  #allocation0 [shape = 'u32[]', space=smem, size = 0x4, offset = 0x4, fixed_abs, tag = 'smem constant byte address 0x4 - core index']
  #allocation1 [shape = 'u32[144,128]{1,0:T(1,128)}', space=vmem, size = 0x12000, scoped, tag = 'internal scratch']
  #allocation2 [shape = 'f32[16,128]{1,0:T(8,128)}', space=vmem, size = 0x2000, scoped, tag = 'scratch operand']
  %s0 = inlined_call_operand.hbm [shape: f32[16,128], index: 0, kind: input, shape index: {}]
  %s1 = inlined_call_operand.hbm [shape: f32[16,128], index: 1, kind: input, shape index: {}]
  %s2 = inlined_call_operand.hbm [shape: f32[1,1], index: 2, kind: output, shape index: {}]
  %s3 = sld [smem:[#allocation0]]
  $region34: #{tpu_custom_call.1} parent=0
    _
  %s5 = ssub.s32 1, %s3
  %s6 = scalar_select 0, %s5, %s3
  $region1: #{tpu_custom_call.1} parent=0
    #allocation3 [shape = 'u8[8192]{0}', space=vmem, size = 0x2000, scoped, tag = 'input window, operand 0, single buffered']
    #allocation4 [shape = 's32[1]{0}', space=sflag, size = 0x4, scoped, tag = 'scoped memory for tpu_custom_call.1']
    #allocation5 [shape = 's32[1]{0}', space=sflag, size = 0x4, scoped, tag = 'scoped memory for tpu_custom_call.1']
    #allocation6 [shape = 'u8[8192]{0}', space=vmem, size = 0x2000, scoped, tag = 'input window, operand 1, single buffered']
    #allocation7 [shape = 's32[1]{0}', space=sflag, size = 0x4, scoped, tag = 'scoped memory for tpu_custom_call.1']
    #allocation8 [shape = 'u8[512]{0}', space=vmem, size = 0x400, scoped, tag = 'output window, operand 0, single buffered']
    %7 = vsyncpa [#allocation4], 0
    %8 = vsyncpa [#allocation7], 0
    %9 = vsyncpa [#allocation5], 0
    // Predicated region
    $region2: #{tpu_custom_call.1} parent=1 // pred_check
      _
    $region3: #{tpu_custom_call.1} parent=1 // pred_check_branch
      %11 = sbr.rel (0) target = $region5
    $region4: #{tpu_custom_call.1} parent=1 // pred_region
      %s13 = ssub.s32 256, 256
      %14 = vsyncadd [#allocation4], %s13
      %s15 = sshll.u32 [#allocation3], 4
      %s16 = int_to_ptr.vmem [resolvable:$true] %s15
      %21 = dma.hbm_to_vmem [thread:$0]  %s0, 256, %s16, [#allocation4], 128, 128, 8
    $region5: #{tpu_custom_call.1} parent=1 // pred_fallthru
      _
    // Predicated region
    $region6: #{tpu_custom_call.1} parent=1 // pred_check
      _
    $region7: #{tpu_custom_call.1} parent=1 // pred_check_branch
      %23 = sbr.rel (0) target = $region9
    $region8: #{tpu_custom_call.1} parent=1 // pred_region
      %s25 = ssub.s32 256, 256
      %26 = vsyncadd [#allocation7], %s25
      %s27 = sshll.u32 [#allocation6], 4
      %s28 = int_to_ptr.vmem [resolvable:$true] %s27
      %33 = dma.hbm_to_vmem [thread:$0]  %s1, 256, %s28, [#allocation7], 128, 128, 8
    $region9: #{tpu_custom_call.1} parent=1 // pred_fallthru
      _
    // Predicated region
    $region10: #{tpu_custom_call.1} parent=1 // pred_check
      _
    $region11: #{tpu_custom_call.1} parent=1 // pred_check_branch
      %35 = sbr.rel (0) target = $region13
    $region12: #{tpu_custom_call.1} parent=1 // pred_region
      %36 = dma.done [#allocation4], 256
    $region13: #{tpu_custom_call.1} parent=1 // pred_fallthru
      _
    // Predicated region
    $region14: #{tpu_custom_call.1} parent=1 // pred_check
      _
    $region15: #{tpu_custom_call.1} parent=1 // pred_check_branch
      %38 = sbr.rel (0) target = $region17
    $region16: #{tpu_custom_call.1} parent=1 // pred_region
      %39 = dma.done [#allocation7], 256
    $region17: #{tpu_custom_call.1} parent=1 // pred_fallthru
      _
    %p40 = scmp.eq.s32.totalorder 0, 0
    // Predicated region
    $region18: #{tpu_custom_call.1} parent=1 // pred_check
      %p41 = pneg %p40
    $region19: #{tpu_custom_call.1} parent=1 // pred_check_branch
      %43 = sbr.rel (%p41) target = $region21
    $region20: #{tpu_custom_call.1} parent=1 // pred_region
      %44 = vst [vmem:[#allocation2] sm:$0xff] 0.0
      %45 = vst [vmem:[#allocation2 + $0x8] sm:$0xff] 0.0
    $region21: #{tpu_custom_call.1} parent=1 // pred_fallthru
      _
    %v46 = vld [vmem:[#allocation3] sm:$0xff]
    %v47 = vld [vmem:[#allocation3 + $0x8] sm:$0xff]
    %v48 = vld [vmem:[#allocation6] sm:$0xff]
    %v49 = vld [vmem:[#allocation6 + $0x8] sm:$0xff]
    %v50 = vsub.f32 %v46, %v48
    %v51 = vsub.f32 %v47, %v49
    %v52 = vand.u32 2147483647, %v50
    %v53 = vand.u32 2147483647, %v51
    %v54 = vmul.f32 %v50, %v50
    %v55 = vmul.f32 %v51, %v51
    %vm56 = vcmp.lt.f32.partialorder %v52, 1.0
    %vm57 = vcmp.lt.f32.partialorder %v53, 1.0
    %v58 = vmul.f32 %v54, 1.025
    %v59 = vmul.f32 %v55, 1.025
    %v60 = vmul.f32 %v52, 0.1
    %v61 = vmul.f32 %v53, 0.1
    %v62 = vadd.f32 %v58, %v60
    %v63 = vadd.f32 %v59, %v61
    %v64 = vmul.f32 %v52, 0.15
    %v65 = vmul.f32 %v53, 0.15
    %v66 = vadd.f32 %v54, %v64
    %v67 = vadd.f32 %v55, %v65
    %v68 = vadd.f32 %v66, -0.025
    %v69 = vadd.f32 %v67, -0.025
    %v70 = vsel %vm56, %v62, %v68
    %v71 = vsel %vm57, %v63, %v69
    %v72 = vld [vmem:[#allocation2] sm:$0xff]
    %v73 = vld [vmem:[#allocation2 + $0x8] sm:$0xff]
    %v74 = vadd.f32 %v72, %v70
    %v75 = vadd.f32 %v73, %v71
    %76 = vst [vmem:[#allocation2] sm:$0xff] %v74
    %77 = vst [vmem:[#allocation2 + $0x8] sm:$0xff] %v75
    // Predicated region
    $region22: #{tpu_custom_call.1} parent=1 // pred_check
      %p78 = pneg %p40
    $region23: #{tpu_custom_call.1} parent=1 // pred_check_branch
      %80 = sbr.rel (%p78) target = $region25
    $region24: #{tpu_custom_call.1} parent=1 // pred_region
      %v81 = vld [vmem:[#allocation2] sm:$0xff]
      %v82 = vld [vmem:[#allocation2 + $0x8] sm:$0xff]
      %v83 = vadd.f32 %v81, %v82
      %84 = vadd.xlane.f32.xlu0 %v83
      %v85 = vpop.xlane.xlu0 %84
      %v86 = vrot.slane %v85, 4
      %v87 = vadd.f32 %v85, %v86
      %v88 = vrot.slane %v87, 2
      %v89 = vadd.f32 %v87, %v88
      %v90 = vrot.slane %v89, 1
      %v91 = vadd.f32 %v89, %v90
      %s92 = vtos %v91
      %v93 = vstv %s92
      %v94 = vmul.f32 %v93, 0.00048828125
      %vm95 = vcmask 0
      %96 = vst.msk [vmem:[#allocation8] sm:$0x1] %vm95, %v94
    $region25: #{tpu_custom_call.1} parent=1 // pred_fallthru
      _
    // Predicated region
    $region26: #{tpu_custom_call.1} parent=1 // pred_check
      _
    $region27: #{tpu_custom_call.1} parent=1 // pred_check_branch
      %98 = sbr.rel (0) target = $region29
    $region28: #{tpu_custom_call.1} parent=1 // pred_region
      %s100 = ssub.s32 16, 16
      %101 = vsyncadd [#allocation5], %s100
      %s103 = sshll.u32 [#allocation8], 4
      %s104 = int_to_ptr.vmem [resolvable:$true] %s103
      %106 = dma.vmem_to_hbm [thread:$0]  %s104, 16, %s2, [#allocation5]
    $region29: #{tpu_custom_call.1} parent=1 // pred_fallthru
      _
    // Predicated region
    $region30: #{tpu_custom_call.1} parent=1 // pred_check
      _
    $region31: #{tpu_custom_call.1} parent=1 // pred_check_branch
      %108 = sbr.rel (0) target = $region33
    $region32: #{tpu_custom_call.1} parent=1 // pred_region
      %109 = dma.done [#allocation5], 16
    $region33: #{tpu_custom_call.1} parent=1 // pred_fallthru
      _
    %110 = vsyncpa [#allocation4], 1
    %111 = vsyncpa [#allocation7], 1
    %112 = vsyncpa [#allocation5], 1

</llo_original>
